<compile_context>
chip_gen: v6e
topology: v6e:2x2x1
jax: 0.10.0
libtpu: 0.0.40
codegen_flags: <defaults>
</compile_context>

<pallas_src>
import functools

import jax
import jax.numpy as jnp
from jax import lax
from jax.experimental import pallas as pl
from jax.experimental.pallas import tpu as pltpu


def _round_up(x, m):
    return ((x + m - 1) // m) * m


# ---------------------------------------------------------------------------
# Parameter initialization (deterministic, mirrors nn.LSTM shapes + reset_bias)
# ---------------------------------------------------------------------------
def init_params(key, enc_hidden_dim, dec_hidden_dim, dec_output_dim):
    E, H, P = enc_hidden_dim, dec_hidden_dim, dec_output_dim
    bound = 1.0 / float(H) ** 0.5
    ks = jax.random.split(key, 16)

    def unif(k, shape):
        return jax.random.uniform(k, shape, jnp.float32, -bound, bound)

    # layer 0: input = E + P, hidden = H, proj = P
    w_ih0 = unif(ks[0], (4 * H, E + P))
    w_hh0 = unif(ks[1], (4 * H, P))
    w_hr0 = unif(ks[2], (P, H))
    b_ih0 = unif(ks[3], (4 * H,)).at[H:2 * H].set(1.0)   # reset_bias
    b_hh0 = unif(ks[4], (4 * H,)).at[H:2 * H].set(1.0)
    # layer 1: input = P (projected output of layer 0)
    w_ih1 = unif(ks[5], (4 * H, P))
    w_hh1 = unif(ks[6], (4 * H, P))
    w_hr1 = unif(ks[7], (P, H))
    b_ih1 = unif(ks[8], (4 * H,)).at[H:2 * H].set(1.0)
    b_hh1 = unif(ks[9], (4 * H,)).at[H:2 * H].set(1.0)

    h_0 = jax.random.normal(ks[10], (2, P), jnp.float32)   # proj-sized h state
    c_0 = jax.random.normal(ks[11], (2, H), jnp.float32)
    s = jax.random.normal(ks[12], (1, P), jnp.float32)

    return dict(w_ih0=w_ih0, w_hh0=w_hh0, w_hr0=w_hr0, b_ih0=b_ih0, b_hh0=b_hh0,
                w_ih1=w_ih1, w_hh1=w_hh1, w_hr1=w_hr1, b_ih1=b_ih1, b_hh1=b_hh1,
                h_0=h_0, c_0=c_0, s=s)


# ---------------------------------------------------------------------------
# Pallas kernel
# ---------------------------------------------------------------------------
def _make_decoder_kernel(B, E, H, P, N, future):
    H4 = 4 * H
    H8 = 8 * H
    PP = _round_up(max(P, 1), 128)   # lane padding for the whr1 output block

    def kernel(enc_ref,      # (N*B, E)        node-major encoder outputs
               wih0e_ref,    # (E, 4H)         enc slice of layer-0 W_ih
               wab_ref,      # (H, 16H + PP)   [W_A | W_B] fused weights
               misc_ref,     # (6, 4H)         b0, b1, g0r_init, g1r_init, c0, c1
               out_ref,      # (N*future*B, P) flat outputs
               enc_sc):      # VMEM scratch (N*B, 4H)

        # ---- hoisted, executed once (off the serial recurrence) ----
        b0 = misc_ref[0:1, :]
        enc_sc[...] = (
            jnp.dot(enc_ref[...], wih0e_ref[...],
                    preferred_element_type=jnp.float32) + b0)        # (N*B, 4H)

        w_a = wab_ref[:, :H8]          # [whr0@wih1 | whr0@whh0]        (H, 8H)
        w_b = wab_ref[:, H8:]          # [whr1@wih0p | whr1@whh1 | whr1](H, 8H+PP)
        mxu_dtype = wab_ref.dtype

        b1b = jnp.broadcast_to(misc_ref[1:2, :], (B, H4))
        g0r0 = jnp.broadcast_to(misc_ref[2:3, :], (B, H4))   # s@wih0p + h0@whh0
        g1r0 = jnp.broadcast_to(misc_ref[3:4, :], (B, H4))   # h1@whh1
        c00 = jnp.broadcast_to(misc_ref[4:5, :H], (B, H))
        c10 = jnp.broadcast_to(misc_ref[5:6, :H], (B, H))

        def lstm_half(g, c_prev):
            # Full-vreg activations: 2 EUP pushes over (B,4H) + 1 over (B,H).
            sg = jax.nn.sigmoid(g)
            tg = jnp.tanh(g)
            i = sg[:, 0 * H:1 * H]
            f = sg[:, 1 * H:2 * H]
            o = sg[:, 3 * H:4 * H]
            gg = tg[:, 2 * H:3 * H]
            c_new = f * c_prev + i * gg
            return o * jnp.tanh(c_new), c_new

        # TODO(synk): node_mean is the scalar 0 (module default mean=0); a 4-D
        # `mean` tensor would just add a per-node bias to the loop input and
        # the stored outputs here.
        def node_body(n, carry):
            g0r, g1r, c0, c1 = carry
            row0 = pl.multiple_of(n * B, B)
            enc_b = enc_sc[pl.ds(row0, B), :]                 # (B,4H) t-invariant
            for t in range(future):                           # short, unrolled
                # layer 0: enc(+b0) + carried recurrent contributions
                h0f, c0 = lstm_half(enc_b + g0r, c0)
                a = jnp.dot(h0f.astype(mxu_dtype), w_a,
                            preferred_element_type=jnp.float32)       # (B, 8H)
                # layer 1 (eval mode: inter-layer dropout disabled)
                h1f, c1 = lstm_half(a[:, :H4] + g1r + b1b, c1)
                bo = jnp.dot(h1f.astype(mxu_dtype), w_b,
                             preferred_element_type=jnp.float32)      # (B, 8H+PP)

                y = bo[:, H8:H8 + P]                          # h1 proj == output
                orow = pl.multiple_of((n * future + t) * B, B)
                out_ref[pl.ds(orow, B), :] = y

                g0r = bo[:, :H4] + a[:, H4:H8]   # next-step y@wih0p + h0@whh0
                g1r = bo[:, H4:H8]               # next-step h1@whh1
            return (g0r, g1r, c0, c1)

        lax.fori_loop(0, N, node_body, (g0r0, g1r0, c00, c10))

    return kernel


def decoder_forward(enc_outputs, params, future, *, mxu_dtype=jnp.float32):
    """enc_outputs: (B, 1, N, E) as in PyTorch. Returns (B, future, N, P).

    mxu_dtype=jnp.bfloat16 casts MXU operands (weights + activations fed to
    jnp.dot) for v6e/v7x latency; elementwise/gate math stays f32. Kept at f32
    by default so the 1e-3 reference tolerance holds.
    """
    B, _, N, E = enc_outputs.shape
    P = params["h_0"].shape[1]
    H = params["c_0"].shape[1]
    H4, H8 = 4 * H, 8 * H
    PP = _round_up(max(P, 1), 128)

    # kernel-facing layouts (pre-transposed so the kernel does x @ W)
    enc_all = jnp.transpose(enc_outputs[:, 0], (1, 0, 2)).reshape(N * B, E)
    wih0e = params["w_ih0"][:, :E].T                      # (E, 4H)
    wih0p = params["w_ih0"][:, E:].T                      # (P, 4H)
    whh0 = params["w_hh0"].T                              # (P, 4H)
    whr0 = params["w_hr0"].T                              # (H, P)
    wih1 = params["w_ih1"].T                              # (P, 4H)
    whh1 = params["w_hh1"].T                              # (P, 4H)
    whr1 = params["w_hr1"].T                              # (H, P)

    # Projection matrices folded into downstream gate weights (2 dots/step):
    #   W_A = [whr0@wih1 | whr0@whh0]                       cols [0,8H)
    #   W_B = [whr1@wih0p | whr1@whh1 | whr1 (lane-padded)]  cols [8H,16H+PP)
    # Critical-path slices (layer-1 gate part, next-step y-gate part) sit in
    # the first 128 lanes of their block (v5e column-pass ordering).
    wab = jnp.zeros((H, 16 * H + PP), jnp.float32)
    wab = wab.at[:, 0:H4].set(whr0 @ wih1)
    wab = wab.at[:, H4:H8].set(whr0 @ whh0)
    wab = wab.at[:, H8:H8 + H4].set(whr1 @ wih0p)
    wab = wab.at[:, H8 + H4:16 * H].set(whr1 @ whh1)
    wab = wab.at[:, 16 * H:16 * H + P].set(whr1)

    # Misc slab: fused biases, initial gate-projected recurrent state, c-state.
    misc = jnp.zeros((6, H4), jnp.float32)
    misc = misc.at[0].set(params["b_ih0"] + params["b_hh0"])
    misc = misc.at[1].set(params["b_ih1"] + params["b_hh1"])
    misc = misc.at[2].set((params["s"] @ wih0p + params["h_0"][0:1] @ whh0)[0])
    misc = misc.at[3].set((params["h_0"][1:2] @ whh1)[0])
    misc = misc.at[4, :H].set(params["c_0"][0])
    misc = misc.at[5, :H].set(params["c_0"][1])

    enc_all = enc_all.astype(mxu_dtype)
    wih0e = wih0e.astype(mxu_dtype)
    wab = wab.astype(mxu_dtype)

    full = lambda shape: pl.BlockSpec(shape, lambda i: (0,) * len(shape))
    rows_out = N * future * B

    # TODO(synk): if N*B*E / N*B*4H grow large (v7x: 64 MiB VMEM), stream enc
    # per node (memory_space=pl.ANY + per-node DMA) and set vmem_limit_bytes;
    # at these sizes everything fits trivially.
    out = pl.pallas_call(
        _make_decoder_kernel(B, E, H, P, N, future),
        out_shape=jax.ShapeDtypeStruct((rows_out, P), jnp.float32),
        grid=(1,),                                        # single invocation
        in_specs=[
            full((N * B, E)),
            full((E, H4)),
            full((H, 16 * H + PP)),
            full((6, H4)),
        ],
        out_specs=pl.BlockSpec((rows_out, P), lambda i: (0, 0)),
        scratch_shapes=[pltpu.VMEM((N * B, H4), jnp.float32)],
        compiler_params=pltpu.CompilerParams(
            dimension_semantics=("arbitrary",)),
    )(enc_all, wih0e, wab, misc)

    # (N*future*B, P) -> (N, future, B, P) -> (B, future, N, P)
    return jnp.transpose(out.reshape(N, future, B, P), (2, 1, 0, 3))


# ---------------------------------------------------------------------------
# Pure-JAX reference (mirrors the PyTorch loop) for a correctness check
# ---------------------------------------------------------------------------
def decoder_reference(enc_outputs, params, future):
    B, _, N, E = enc_outputs.shape
    P = params["h_0"].shape[1]
    H = params["c_0"].shape[1]

    def cell(x, h, c, w_ih, w_hh, w_hr, b_ih, b_hh):
        g = x @ w_ih.T + h @ w_hh.T + b_ih + b_hh
        i = jax.nn.sigmoid(g[:, :H]); f = jax.nn.sigmoid(g[:, H:2 * H])
        gg = jnp.tanh(g[:, 2 * H:3 * H]); o = jax.nn.sigmoid(g[:, 3 * H:])
        c_new = f * c + i * gg
        return (o * jnp.tanh(c_new)) @ w_hr.T, c_new

    h = [jnp.broadcast_to(params["h_0"][l:l + 1], (B, P)) for l in range(2)]
    c = [jnp.broadcast_to(params["c_0"][l:l + 1], (B, H)) for l in range(2)]
    y = jnp.broadcast_to(params["s"], (B, P))
    outs = []
    for n in range(N):
        enc = enc_outputs[:, 0, n, :]
        per_node = []
        for _ in range(future):
            x0 = jnp.concatenate([enc, y], axis=1)
            h0, c0 = cell(x0, h[0], c[0], params["w_ih0"], params["w_hh0"],
                          params["w_hr0"], params["b_ih0"], params["b_hh0"])
            h1, c1 = cell(h0, h[1], c[1], params["w_ih1"], params["w_hh1"],
                          params["w_hr1"], params["b_ih1"], params["b_hh1"])
            h, c, y = [h0, h1], [c0, c1], h1
            per_node.append(y)
        outs.append(jnp.stack(per_node, axis=1))           # (B, T, P)
    return jnp.stack(outs, axis=2)                          # (B, T, N, P)


if __name__ == "__main__":
    B, E, H, P = 2, 16, 32, 8        # batch, enc_hidden, dec_hidden, dec_output
    N, FUTURE = 4, 3                  # n_nodes, decode horizon

    key = jax.random.PRNGKey(0)
    k_param, k_enc = jax.random.split(key)
    params = init_params(k_param, E, H, P)
    enc_outputs = jax.random.normal(k_enc, (B, 1, N, E), jnp.float32)

    run = jax.jit(functools.partial(decoder_forward, future=FUTURE))
    out = run(enc_outputs, params)
    out = jax.block_until_ready(out)

    ref = decoder_reference(enc_outputs, params, FUTURE)
    assert out.shape == (B, FUTURE, N, P), out.shape
    assert jnp.allclose(out, ref, atol=1e-3, rtol=1e-3), (
        float(jnp.max(jnp.abs(out - ref))))

    print("KERNEL_OK")
</pallas_src>

<mosaic_0001>
module attributes {stable_mosaic.version = 11 : i64} {
  func.func @kernel(%arg0: i32, %arg1: memref<8x16xf32, #tpu.memory_space<vmem>>, %arg2: memref<16x128xf32, #tpu.memory_space<vmem>>, %arg3: memref<32x640xf32, #tpu.memory_space<vmem>>, %arg4: memref<6x128xf32, #tpu.memory_space<vmem>>, %arg5: memref<24x8xf32, #tpu.memory_space<vmem>>, %arg6: memref<8x128xf32, #tpu.memory_space<vmem>>) attributes {dimension_semantics = [#tpu.dimension_semantics<arbitrary>], iteration_bounds = array<i64: 1>, scalar_prefetch = 0 : i64, scratch_operands = 1 : i64, tpu.core_type = #tpu.core_type<tc>, window_params = [{pipeline_mode = #tpu.pipeline_mode<synchronous>, transform_indices = @transform_0, window_bounds = array<i64: 8, 16>}, {pipeline_mode = #tpu.pipeline_mode<synchronous>, transform_indices = @transform_1, window_bounds = array<i64: 16, 128>}, {pipeline_mode = #tpu.pipeline_mode<synchronous>, transform_indices = @transform_2, window_bounds = array<i64: 32, 640>}, {pipeline_mode = #tpu.pipeline_mode<synchronous>, transform_indices = @transform_3, window_bounds = array<i64: 6, 128>}, {pipeline_mode = #tpu.pipeline_mode<synchronous>, transform_indices = @transform_4, window_bounds = array<i64: 24, 8>}]} {
    %c0 = arith.constant 0 : index
    %c0_0 = arith.constant 0 : index
    %0 = vector.load %arg4[%c0, %c0_0] : memref<6x128xf32, #tpu.memory_space<vmem>>, vector<1x128xf32>
    %c0_1 = arith.constant 0 : index
    %c0_2 = arith.constant 0 : index
    %1 = vector.load %arg1[%c0_1, %c0_2] : memref<8x16xf32, #tpu.memory_space<vmem>>, vector<8x16xf32>
    %c0_3 = arith.constant 0 : index
    %c0_4 = arith.constant 0 : index
    %2 = vector.load %arg2[%c0_3, %c0_4] : memref<16x128xf32, #tpu.memory_space<vmem>>, vector<16x128xf32>
    %cst = arith.constant dense<0.000000e+00> : vector<8x128xf32>
    %3 = tpu.matmul %1, %2, %cst {dimension_numbers = #tpu.dot_dimension_numbers<[1], [0], [0], [1], [0, 0, 1, 1], [], []>} : vector<8x16xf32>, vector<16x128xf32>, vector<8x128xf32> -> vector<8x128xf32>
    %4 = vector.broadcast %0 : vector<1x128xf32> to vector<8x128xf32>
    %5 = arith.addf %3, %4 : vector<8x128xf32>
    %c0_5 = arith.constant 0 : index
    %c0_6 = arith.constant 0 : index
    %6 = vector.load %arg6[%c0_5, %c0_6] : memref<8x128xf32, #tpu.memory_space<vmem>>, vector<8x128xf32>
    tpu.vector_store %arg6[%c0_5, %c0_6], %5 {strides = array<i32>} : memref<8x128xf32, #tpu.memory_space<vmem>>, vector<8x128xf32>,
    %c0_7 = arith.constant 0 : index
    %c0_8 = arith.constant 0 : index
    %7 = vector.load %arg3[%c0_7, %c0_8] : memref<32x640xf32, #tpu.memory_space<vmem>>, vector<32x256xf32>
    %c0_9 = arith.constant 0 : index
    %c256 = arith.constant 256 : index
    %8 = vector.load %arg3[%c0_9, %c256] : memref<32x640xf32, #tpu.memory_space<vmem>>, vector<32x384xf32>
    %c1 = arith.constant 1 : index
    %c0_10 = arith.constant 0 : index
    %9 = vector.load %arg4[%c1, %c0_10] : memref<6x128xf32, #tpu.memory_space<vmem>>, vector<1x128xf32>
    %10 = vector.shape_cast %9 : vector<1x128xf32> to vector<1x128xf32>
    %11 = vector.broadcast %10 : vector<1x128xf32> to vector<2x128xf32>
    %c2 = arith.constant 2 : index
    %c0_11 = arith.constant 0 : index
    %12 = vector.load %arg4[%c2, %c0_11] : memref<6x128xf32, #tpu.memory_space<vmem>>, vector<1x128xf32>
    %13 = vector.shape_cast %12 : vector<1x128xf32> to vector<1x128xf32>
    %14 = vector.broadcast %13 : vector<1x128xf32> to vector<2x128xf32>
    %c3 = arith.constant 3 : index
    %c0_12 = arith.constant 0 : index
    %15 = vector.load %arg4[%c3, %c0_12] : memref<6x128xf32, #tpu.memory_space<vmem>>, vector<1x128xf32>
    %16 = vector.shape_cast %15 : vector<1x128xf32> to vector<1x128xf32>
    %17 = vector.broadcast %16 : vector<1x128xf32> to vector<2x128xf32>
    %c4 = arith.constant 4 : index
    %c0_13 = arith.constant 0 : index
    %18 = vector.load %arg4[%c4, %c0_13] : memref<6x128xf32, #tpu.memory_space<vmem>>, vector<1x32xf32>
    %19 = vector.shape_cast %18 : vector<1x32xf32> to vector<1x32xf32>
    %20 = vector.broadcast %19 : vector<1x32xf32> to vector<2x32xf32>
    %c5 = arith.constant 5 : index
    %c0_14 = arith.constant 0 : index
    %21 = vector.load %arg4[%c5, %c0_14] : memref<6x128xf32, #tpu.memory_space<vmem>>, vector<1x32xf32>
    %22 = vector.shape_cast %21 : vector<1x32xf32> to vector<1x32xf32>
    %23 = vector.broadcast %22 : vector<1x32xf32> to vector<2x32xf32>
    %c0_i32 = arith.constant 0 : i32
    %c4_i32 = arith.constant 4 : i32
    %24 = arith.addi %c0_i32, %c4_i32 : i32
    %c1_i32 = arith.constant 1 : i32
    %25:4 = scf.for %arg7 = %c0_i32 to %24 step %c1_i32 iter_args(%arg8 = %14, %arg9 = %17, %arg10 = %20, %arg11 = %23) -> (vector<2x128xf32>, vector<2x128xf32>, vector<2x32xf32>, vector<2x32xf32>)  : i32 {
      %c2_i32 = arith.constant 2 : i32
      %26 = arith.muli %arg7, %c2_i32 : i32
      %27 = tpu.assume_multiple %26, 2 : i32
      %28 = arith.index_cast %27 : i32 to index
      %c0_16 = arith.constant 0 : index
      %29 = vector.load %arg6[%28, %c0_16] : memref<8x128xf32, #tpu.memory_space<vmem>>, vector<2x128xf32>
      %30 = arith.addf %29, %arg8 : vector<2x128xf32>
      %31 = arith.negf %30 : vector<2x128xf32>
      %32 = math.exp %31 : vector<2x128xf32>
      %cst_17 = arith.constant 1.000000e+00 : f32
      %33 = vector.broadcast %cst_17 : f32 to vector<2x128xf32>
      %34 = arith.addf %33, %32 : vector<2x128xf32>
      %35 = arith.divf %33, %34 : vector<2x128xf32>
      %36 = math.tanh %30 : vector<2x128xf32>
      %37 = vector.extract_strided_slice %35 {offsets = [0, 0], sizes = [2, 32], strides = [1, 1]} : vector<2x128xf32> to vector<2x32xf32>
      %38 = vector.extract_strided_slice %35 {offsets = [0, 32], sizes = [2, 32], strides = [1, 1]} : vector<2x128xf32> to vector<2x32xf32>
      %39 = vector.extract_strided_slice %35 {offsets = [0, 96], sizes = [2, 32], strides = [1, 1]} : vector<2x128xf32> to vector<2x32xf32>
      %40 = vector.extract_strided_slice %36 {offsets = [0, 64], sizes = [2, 32], strides = [1, 1]} : vector<2x128xf32> to vector<2x32xf32>
      %41 = arith.mulf %38, %arg10 : vector<2x32xf32>
      %42 = arith.mulf %37, %40 : vector<2x32xf32>
      %43 = arith.addf %41, %42 : vector<2x32xf32>
      %44 = math.tanh %43 : vector<2x32xf32>
      %45 = arith.mulf %39, %44 : vector<2x32xf32>
      %cst_18 = arith.constant dense<0.000000e+00> : vector<2x256xf32>
      %46 = tpu.matmul %45, %7, %cst_18 {dimension_numbers = #tpu.dot_dimension_numbers<[1], [0], [0], [1], [0, 0, 1, 1], [], []>} : vector<2x32xf32>, vector<32x256xf32>, vector<2x256xf32> -> vector<2x256xf32>
      %47 = vector.extract_strided_slice %46 {offsets = [0, 0], sizes = [2, 128], strides = [1, 1]} : vector<2x256xf32> to vector<2x128xf32>
      %48 = arith.addf %47, %arg9 : vector<2x128xf32>
      %49 = arith.addf %48, %11 : vector<2x128xf32>
      %50 = arith.negf %49 : vector<2x128xf32>
      %51 = math.exp %50 : vector<2x128xf32>
      %cst_19 = arith.constant 1.000000e+00 : f32
      %52 = vector.broadcast %cst_19 : f32 to vector<2x128xf32>
      %53 = arith.addf %52, %51 : vector<2x128xf32>
      %54 = arith.divf %52, %53 : vector<2x128xf32>
      %55 = math.tanh %49 : vector<2x128xf32>
      %56 = vector.extract_strided_slice %54 {offsets = [0, 0], sizes = [2, 32], strides = [1, 1]} : vector<2x128xf32> to vector<2x32xf32>
      %57 = vector.extract_strided_slice %54 {offsets = [0, 32], sizes = [2, 32], strides = [1, 1]} : vector<2x128xf32> to vector<2x32xf32>
      %58 = vector.extract_strided_slice %54 {offsets = [0, 96], sizes = [2, 32], strides = [1, 1]} : vector<2x128xf32> to vector<2x32xf32>
      %59 = vector.extract_strided_slice %55 {offsets = [0, 64], sizes = [2, 32], strides = [1, 1]} : vector<2x128xf32> to vector<2x32xf32>
      %60 = arith.mulf %57, %arg11 : vector<2x32xf32>
      %61 = arith.mulf %56, %59 : vector<2x32xf32>
      %62 = arith.addf %60, %61 : vector<2x32xf32>
      %63 = math.tanh %62 : vector<2x32xf32>
      %64 = arith.mulf %58, %63 : vector<2x32xf32>
      %cst_20 = arith.constant dense<0.000000e+00> : vector<2x384xf32>
      %65 = tpu.matmul %64, %8, %cst_20 {dimension_numbers = #tpu.dot_dimension_numbers<[1], [0], [0], [1], [0, 0, 1, 1], [], []>} : vector<2x32xf32>, vector<32x384xf32>, vector<2x384xf32> -> vector<2x384xf32>
      %66 = vector.extract_strided_slice %65 {offsets = [0, 256], sizes = [2, 8], strides = [1, 1]} : vector<2x384xf32> to vector<2x8xf32>
      %c3_i32 = arith.constant 3 : i32
      %67 = arith.muli %arg7, %c3_i32 : i32
      %c0_i32_21 = arith.constant 0 : i32
      %68 = arith.addi %67, %c0_i32_21 : i32
      %c2_i32_22 = arith.constant 2 : i32
      %69 = arith.muli %68, %c2_i32_22 : i32
      %70 = tpu.assume_multiple %69, 2 : i32
      %71 = arith.index_cast %70 : i32 to index
      %c0_23 = arith.constant 0 : index
      %72 = vector.load %arg5[%71, %c0_23] : memref<24x8xf32, #tpu.memory_space<vmem>>, vector<2x8xf32>
      tpu.vector_store %arg5[%71, %c0_23], %66 {strides = array<i32>} : memref<24x8xf32, #tpu.memory_space<vmem>>, vector<2x8xf32>,
      %73 = vector.extract_strided_slice %65 {offsets = [0, 0], sizes = [2, 128], strides = [1, 1]} : vector<2x384xf32> to vector<2x128xf32>
      %74 = vector.extract_strided_slice %46 {offsets = [0, 128], sizes = [2, 128], strides = [1, 1]} : vector<2x256xf32> to vector<2x128xf32>
      %75 = arith.addf %73, %74 : vector<2x128xf32>
      %76 = vector.extract_strided_slice %65 {offsets = [0, 128], sizes = [2, 128], strides = [1, 1]} : vector<2x384xf32> to vector<2x128xf32>
      %77 = arith.addf %29, %75 : vector<2x128xf32>
      %78 = arith.negf %77 : vector<2x128xf32>
      %79 = math.exp %78 : vector<2x128xf32>
      %cst_24 = arith.constant 1.000000e+00 : f32
      %80 = vector.broadcast %cst_24 : f32 to vector<2x128xf32>
      %81 = arith.addf %80, %79 : vector<2x128xf32>
      %82 = arith.divf %80, %81 : vector<2x128xf32>
      %83 = math.tanh %77 : vector<2x128xf32>
      %84 = vector.extract_strided_slice %82 {offsets = [0, 0], sizes = [2, 32], strides = [1, 1]} : vector<2x128xf32> to vector<2x32xf32>
      %85 = vector.extract_strided_slice %82 {offsets = [0, 32], sizes = [2, 32], strides = [1, 1]} : vector<2x128xf32> to vector<2x32xf32>
      %86 = vector.extract_strided_slice %82 {offsets = [0, 96], sizes = [2, 32], strides = [1, 1]} : vector<2x128xf32> to vector<2x32xf32>
      %87 = vector.extract_strided_slice %83 {offsets = [0, 64], sizes = [2, 32], strides = [1, 1]} : vector<2x128xf32> to vector<2x32xf32>
      %88 = arith.mulf %85, %43 : vector<2x32xf32>
      %89 = arith.mulf %84, %87 : vector<2x32xf32>
      %90 = arith.addf %88, %89 : vector<2x32xf32>
      %91 = math.tanh %90 : vector<2x32xf32>
      %92 = arith.mulf %86, %91 : vector<2x32xf32>
      %cst_25 = arith.constant dense<0.000000e+00> : vector<2x256xf32>
      %93 = tpu.matmul %92, %7, %cst_25 {dimension_numbers = #tpu.dot_dimension_numbers<[1], [0], [0], [1], [0, 0, 1, 1], [], []>} : vector<2x32xf32>, vector<32x256xf32>, vector<2x256xf32> -> vector<2x256xf32>
      %94 = vector.extract_strided_slice %93 {offsets = [0, 0], sizes = [2, 128], strides = [1, 1]} : vector<2x256xf32> to vector<2x128xf32>
      %95 = arith.addf %94, %76 : vector<2x128xf32>
      %96 = arith.addf %95, %11 : vector<2x128xf32>
      %97 = arith.negf %96 : vector<2x128xf32>
      %98 = math.exp %97 : vector<2x128xf32>
      %cst_26 = arith.constant 1.000000e+00 : f32
      %99 = vector.broadcast %cst_26 : f32 to vector<2x128xf32>
      %100 = arith.addf %99, %98 : vector<2x128xf32>
      %101 = arith.divf %99, %100 : vector<2x128xf32>
      %102 = math.tanh %96 : vector<2x128xf32>
      %103 = vector.extract_strided_slice %101 {offsets = [0, 0], sizes = [2, 32], strides = [1, 1]} : vector<2x128xf32> to vector<2x32xf32>
      %104 = vector.extract_strided_slice %101 {offsets = [0, 32], sizes = [2, 32], strides = [1, 1]} : vector<2x128xf32> to vector<2x32xf32>
      %105 = vector.extract_strided_slice %101 {offsets = [0, 96], sizes = [2, 32], strides = [1, 1]} : vector<2x128xf32> to vector<2x32xf32>
      %106 = vector.extract_strided_slice %102 {offsets = [0, 64], sizes = [2, 32], strides = [1, 1]} : vector<2x128xf32> to vector<2x32xf32>
      %107 = arith.mulf %104, %62 : vector<2x32xf32>
      %108 = arith.mulf %103, %106 : vector<2x32xf32>
      %109 = arith.addf %107, %108 : vector<2x32xf32>
      %110 = math.tanh %109 : vector<2x32xf32>
      %111 = arith.mulf %105, %110 : vector<2x32xf32>
      %cst_27 = arith.constant dense<0.000000e+00> : vector<2x384xf32>
      %112 = tpu.matmul %111, %8, %cst_27 {dimension_numbers = #tpu.dot_dimension_numbers<[1], [0], [0], [1], [0, 0, 1, 1], [], []>} : vector<2x32xf32>, vector<32x384xf32>, vector<2x384xf32> -> vector<2x384xf32>
      %113 = vector.extract_strided_slice %112 {offsets = [0, 256], sizes = [2, 8], strides = [1, 1]} : vector<2x384xf32> to vector<2x8xf32>
      %c3_i32_28 = arith.constant 3 : i32
      %114 = arith.muli %arg7, %c3_i32_28 : i32
      %c1_i32_29 = arith.constant 1 : i32
      %115 = arith.addi %114, %c1_i32_29 : i32
      %c2_i32_30 = arith.constant 2 : i32
      %116 = arith.muli %115, %c2_i32_30 : i32
      %117 = tpu.assume_multiple %116, 2 : i32
      %118 = arith.index_cast %117 : i32 to index
      %c0_31 = arith.constant 0 : index
      %119 = vector.load %arg5[%118, %c0_31] : memref<24x8xf32, #tpu.memory_space<vmem>>, vector<2x8xf32>
      tpu.vector_store %arg5[%118, %c0_31], %113 {strides = array<i32>} : memref<24x8xf32, #tpu.memory_space<vmem>>, vector<2x8xf32>,
      %120 = vector.extract_strided_slice %112 {offsets = [0, 0], sizes = [2, 128], strides = [1, 1]} : vector<2x384xf32> to vector<2x128xf32>
      %121 = vector.extract_strided_slice %93 {offsets = [0, 128], sizes = [2, 128], strides = [1, 1]} : vector<2x256xf32> to vector<2x128xf32>
      %122 = arith.addf %120, %121 : vector<2x128xf32>
      %123 = vector.extract_strided_slice %112 {offsets = [0, 128], sizes = [2, 128], strides = [1, 1]} : vector<2x384xf32> to vector<2x128xf32>
      %124 = arith.addf %29, %122 : vector<2x128xf32>
      %125 = arith.negf %124 : vector<2x128xf32>
      %126 = math.exp %125 : vector<2x128xf32>
      %cst_32 = arith.constant 1.000000e+00 : f32
      %127 = vector.broadcast %cst_32 : f32 to vector<2x128xf32>
      %128 = arith.addf %127, %126 : vector<2x128xf32>
      %129 = arith.divf %127, %128 : vector<2x128xf32>
      %130 = math.tanh %124 : vector<2x128xf32>
      %131 = vector.extract_strided_slice %129 {offsets = [0, 0], sizes = [2, 32], strides = [1, 1]} : vector<2x128xf32> to vector<2x32xf32>
      %132 = vector.extract_strided_slice %129 {offsets = [0, 32], sizes = [2, 32], strides = [1, 1]} : vector<2x128xf32> to vector<2x32xf32>
      %133 = vector.extract_strided_slice %129 {offsets = [0, 96], sizes = [2, 32], strides = [1, 1]} : vector<2x128xf32> to vector<2x32xf32>
      %134 = vector.extract_strided_slice %130 {offsets = [0, 64], sizes = [2, 32], strides = [1, 1]} : vector<2x128xf32> to vector<2x32xf32>
      %135 = arith.mulf %132, %90 : vector<2x32xf32>
      %136 = arith.mulf %131, %134 : vector<2x32xf32>
      %137 = arith.addf %135, %136 : vector<2x32xf32>
      %138 = math.tanh %137 : vector<2x32xf32>
      %139 = arith.mulf %133, %138 : vector<2x32xf32>
      %cst_33 = arith.constant dense<0.000000e+00> : vector<2x256xf32>
      %140 = tpu.matmul %139, %7, %cst_33 {dimension_numbers = #tpu.dot_dimension_numbers<[1], [0], [0], [1], [0, 0, 1, 1], [], []>} : vector<2x32xf32>, vector<32x256xf32>, vector<2x256xf32> -> vector<2x256xf32>
      %141 = vector.extract_strided_slice %140 {offsets = [0, 0], sizes = [2, 128], strides = [1, 1]} : vector<2x256xf32> to vector<2x128xf32>
      %142 = arith.addf %141, %123 : vector<2x128xf32>
      %143 = arith.addf %142, %11 : vector<2x128xf32>
      %144 = arith.negf %143 : vector<2x128xf32>
      %145 = math.exp %144 : vector<2x128xf32>
      %cst_34 = arith.constant 1.000000e+00 : f32
      %146 = vector.broadcast %cst_34 : f32 to vector<2x128xf32>
      %147 = arith.addf %146, %145 : vector<2x128xf32>
      %148 = arith.divf %146, %147 : vector<2x128xf32>
      %149 = math.tanh %143 : vector<2x128xf32>
      %150 = vector.extract_strided_slice %148 {offsets = [0, 0], sizes = [2, 32], strides = [1, 1]} : vector<2x128xf32> to vector<2x32xf32>
      %151 = vector.extract_strided_slice %148 {offsets = [0, 32], sizes = [2, 32], strides = [1, 1]} : vector<2x128xf32> to vector<2x32xf32>
      %152 = vector.extract_strided_slice %148 {offsets = [0, 96], sizes = [2, 32], strides = [1, 1]} : vector<2x128xf32> to vector<2x32xf32>
      %153 = vector.extract_strided_slice %149 {offsets = [0, 64], sizes = [2, 32], strides = [1, 1]} : vector<2x128xf32> to vector<2x32xf32>
      %154 = arith.mulf %151, %109 : vector<2x32xf32>
      %155 = arith.mulf %150, %153 : vector<2x32xf32>
      %156 = arith.addf %154, %155 : vector<2x32xf32>
      %157 = math.tanh %156 : vector<2x32xf32>
      %158 = arith.mulf %152, %157 : vector<2x32xf32>
      %cst_35 = arith.constant dense<0.000000e+00> : vector<2x384xf32>
      %159 = tpu.matmul %158, %8, %cst_35 {dimension_numbers = #tpu.dot_dimension_numbers<[1], [0], [0], [1], [0, 0, 1, 1], [], []>} : vector<2x32xf32>, vector<32x384xf32>, vector<2x384xf32> -> vector<2x384xf32>
      %160 = vector.extract_strided_slice %159 {offsets = [0, 256], sizes = [2, 8], strides = [1, 1]} : vector<2x384xf32> to vector<2x8xf32>
      %c3_i32_36 = arith.constant 3 : i32
      %161 = arith.muli %arg7, %c3_i32_36 : i32
      %c2_i32_37 = arith.constant 2 : i32
      %162 = arith.addi %161, %c2_i32_37 : i32
      %c2_i32_38 = arith.constant 2 : i32
      %163 = arith.muli %162, %c2_i32_38 : i32
      %164 = tpu.assume_multiple %163, 2 : i32
      %165 = arith.index_cast %164 : i32 to index
      %c0_39 = arith.constant 0 : index
      %166 = vector.load %arg5[%165, %c0_39] : memref<24x8xf32, #tpu.memory_space<vmem>>, vector<2x8xf32>
      tpu.vector_store %arg5[%165, %c0_39], %160 {strides = array<i32>} : memref<24x8xf32, #tpu.memory_space<vmem>>, vector<2x8xf32>,
      %167 = vector.extract_strided_slice %159 {offsets = [0, 0], sizes = [2, 128], strides = [1, 1]} : vector<2x384xf32> to vector<2x128xf32>
      %168 = vector.extract_strided_slice %140 {offsets = [0, 128], sizes = [2, 128], strides = [1, 1]} : vector<2x256xf32> to vector<2x128xf32>
      %169 = arith.addf %167, %168 : vector<2x128xf32>
      %170 = vector.extract_strided_slice %159 {offsets = [0, 128], sizes = [2, 128], strides = [1, 1]} : vector<2x384xf32> to vector<2x128xf32>
      scf.yield %169, %170, %137, %156 : vector<2x128xf32>, vector<2x128xf32>, vector<2x32xf32>, vector<2x32xf32>
    }
    %c4_i32_15 = arith.constant 4 : i32
    return
  }
  func.func @transform_0(%arg0: i32) -> (i32, i32) {
    %c0_i32 = arith.constant 0 : i32
    %c0_i32_0 = arith.constant 0 : i32
    %c0_i32_1 = arith.constant 0 : i32
    return %c0_i32, %c0_i32_0 : i32, i32
  }
  func.func @transform_1(%arg0: i32) -> (i32, i32) {
    %c0_i32 = arith.constant 0 : i32
    %c0_i32_0 = arith.constant 0 : i32
    %c0_i32_1 = arith.constant 0 : i32
    return %c0_i32, %c0_i32_0 : i32, i32
  }
  func.func @transform_2(%arg0: i32) -> (i32, i32) {
    %c0_i32 = arith.constant 0 : i32
    %c0_i32_0 = arith.constant 0 : i32
    %c0_i32_1 = arith.constant 0 : i32
    return %c0_i32, %c0_i32_0 : i32, i32
  }
  func.func @transform_3(%arg0: i32) -> (i32, i32) {
    %c0_i32 = arith.constant 0 : i32
    %c0_i32_0 = arith.constant 0 : i32
    %c0_i32_1 = arith.constant 0 : i32
    return %c0_i32, %c0_i32_0 : i32, i32
  }
  func.func @transform_4(%arg0: i32) -> (i32, i32) {
    %c0_i32 = arith.constant 0 : i32
    %c0_i32_0 = arith.constant 0 : i32
    %c0_i32_1 = arith.constant 0 : i32
    return %c0_i32, %c0_i32_0 : i32, i32
  }
}

</mosaic_0001>

<llo_original>
// kernel: decoder_forward.1
$region0: #{decoder_forward.1}
  #allocation0 [shape = 'u32[]', space=smem, size = 0x4, offset = 0x4, fixed_abs, tag = 'smem constant byte address 0x4 - core index']
  #allocation1 [shape = 'u32[144,128]{1,0:T(1,128)}', space=vmem, size = 0x12000, scoped, tag = 'internal scratch']
  #allocation2 [shape = 'f32[8,128]{1,0:T(8,128)}', space=vmem, size = 0x1000, scoped, tag = 'scratch operand']
  %s0 = inlined_call_operand.vmem [shape: f32[8,16], index: 0, kind: input, shape index: {}]
  %s1 = inlined_call_operand.vmem [shape: f32[16,128], index: 1, kind: input, shape index: {}]
  %s2 = inlined_call_operand.vmem [shape: f32[32,640], index: 2, kind: input, shape index: {}]
  %s3 = inlined_call_operand.vmem [shape: f32[6,128], index: 3, kind: input, shape index: {}]
  %s4 = inlined_call_operand.vmem [shape: f32[24,8], index: 4, kind: output, shape index: {}]
  %s5 = sld [smem:[#allocation0]]
  $region33: #{decoder_forward.1} parent=0
    _
  %s7 = ssub.s32 1, %s5
  %s8 = scalar_select 0, %s7, %s5
  // Predicated region
  $region2: #{decoder_forward.1} parent=0 // pred_check
    _
  $region3: #{decoder_forward.1} parent=0 // pred_check_branch
    %10 = sbr.rel (0) target = $region5
  $region4: #{decoder_forward.1} parent=0 // pred_region
    _
  $region5: #{decoder_forward.1} parent=0 // pred_fallthru
    _
  // Predicated region
  $region6: #{decoder_forward.1} parent=0 // pred_check
    _
  $region7: #{decoder_forward.1} parent=0 // pred_check_branch
    %12 = sbr.rel (0) target = $region9
  $region8: #{decoder_forward.1} parent=0 // pred_region
    _
  $region9: #{decoder_forward.1} parent=0 // pred_fallthru
    _
  // Predicated region
  $region10: #{decoder_forward.1} parent=0 // pred_check
    _
  $region11: #{decoder_forward.1} parent=0 // pred_check_branch
    %14 = sbr.rel (0) target = $region13
  $region12: #{decoder_forward.1} parent=0 // pred_region
    _
  $region13: #{decoder_forward.1} parent=0 // pred_fallthru
    _
  // Predicated region
  $region14: #{decoder_forward.1} parent=0 // pred_check
    _
  $region15: #{decoder_forward.1} parent=0 // pred_check_branch
    %16 = sbr.rel (0) target = $region17
  $region16: #{decoder_forward.1} parent=0 // pred_region
    _
  $region17: #{decoder_forward.1} parent=0 // pred_fallthru
    _
  %v17 = vld [vmem:[%s3] sm:$0x1]
  %v18 = vld [vmem:[%s0] sm:$0xff]
  %v19 = vld [vmem:[%s1] sm:$0xff]
  %v20 = vld [vmem:[%s1 + $0x8] sm:$0xff]
  %v21 = vlaneseq
  %v22 = vshrl.u32 %v21, 7
  %v23 = vsub.s32 0, %v22
  %v24 = vrot.slane %v17, %v23
  %vm25 = vcmask 130048
  %v27 = vsel %vm25, %v18, 0
  %29 = vmatprep.subr.mxu0 0.0
  %30 = vmatpush1.msra.mxu0 0.0
  %31 = vmatprep.subr.mxu0 0.0
  %32 = vmatpush1.msra.mxu0 0.0
  %33 = vmatprep.subr.mxu0 0.0
  %34 = vmatpush1.msra.mxu0 0.0
  %35 = vmatprep.subr.mxu0 0.0
  %36 = vmatpush1.msra.mxu0 0.0
  %37 = vmatprep.subr.mxu0 0.0
  %38 = vmatpush1.msra.mxu0 0.0
  %39 = vmatprep.subr.mxu0 0.0
  %40 = vmatpush1.msra.mxu0 0.0
  %41 = vmatprep.subr.mxu0 0.0
  %42 = vmatpush1.msra.mxu0 0.0
  %43 = vmatprep.subr.mxu0 0.0
  %44 = vmatpush1.msra.mxu0 0.0
  %45 = vmatprep.subr.mxu0 0.0
  %46 = vmatpush1.msra.mxu0 0.0
  %47 = vmatprep.subr.mxu0 0.0
  %48 = vmatpush1.msra.mxu0 0.0
  %49 = vmatprep.subr.mxu0 0.0
  %50 = vmatpush1.msra.mxu0 0.0
  %51 = vmatprep.subr.mxu0 0.0
  %52 = vmatpush1.msra.mxu0 0.0
  %53 = vmatprep.subr.mxu0 0.0
  %54 = vmatpush1.msra.mxu0 0.0
  %55 = vmatprep.subr.mxu0 0.0
  %56 = vmatpush1.msra.mxu0 0.0
  %57 = vmatprep.subr.mxu0 0.0
  %58 = vmatpush1.msra.mxu0 %v20
  %59 = vmatprep.subr.mxu0 0.0
  %60 = vmatpush1.msra.mxu0 %v19
  %61 = vmatprep.subr.mxu0 0.0
  %62 = vmatpush2.msra.mxu0 0.0
  %63 = vmatprep.subr.mxu0 0.0
  %64 = vmatpush2.msra.mxu0 0.0
  %65 = vmatprep.subr.mxu0 0.0
  %66 = vmatpush2.msra.mxu0 0.0
  %67 = vmatprep.subr.mxu0 0.0
  %68 = vmatpush2.msra.mxu0 0.0
  %69 = vmatprep.subr.mxu0 0.0
  %70 = vmatpush2.msra.mxu0 0.0
  %71 = vmatprep.subr.mxu0 0.0
  %72 = vmatpush2.msra.mxu0 0.0
  %73 = vmatprep.subr.mxu0 0.0
  %74 = vmatpush2.msra.mxu0 0.0
  %75 = vmatprep.subr.mxu0 0.0
  %76 = vmatpush2.msra.mxu0 0.0
  %77 = vmatprep.subr.mxu0 0.0
  %78 = vmatpush2.msra.mxu0 0.0
  %79 = vmatprep.subr.mxu0 0.0
  %80 = vmatpush2.msra.mxu0 0.0
  %81 = vmatprep.subr.mxu0 0.0
  %82 = vmatpush2.msra.mxu0 0.0
  %83 = vmatprep.subr.mxu0 0.0
  %84 = vmatpush2.msra.mxu0 0.0
  %85 = vmatprep.subr.mxu0 0.0
  %86 = vmatpush2.msra.mxu0 0.0
  %87 = vmatprep.subr.mxu0 0.0
  %88 = vmatpush2.msra.mxu0 0.0
  %89 = vmatprep.subr.mxu0 0.0
  %90 = vmatpush2.msra.mxu0 0.0
  %91 = vmatprep.subr.mxu0 0.0
  %92 = vmatpush2.msra.mxu0 0.0
  %93 = vmatprep.mubr.f32.mxu0 0.0
  %94 = vmatmul.mubr.f32.gmra.mxu0 %v27
  %v95 = vpop.f32.mrf.mxu0
  %v96 = vadd.f32 %v24, %v95
  %v97 = vpop.f32.mrf.mxu0
  %98 = vdwg.mxu0
  %99 = vst [vmem:[#allocation2] sm:$0xff] %v96
  %v100 = vld [vmem:[%s2] sm:$0xff]
  %v101 = vld [vmem:[%s2 + $0x8] sm:$0xff]
  %v102 = vld [vmem:[%s2 + $0x28] sm:$0xff]
  %v103 = vld [vmem:[%s2 + $0x30] sm:$0xff]
  %v104 = vld [vmem:[%s2 + $0x50] sm:$0xff]
  %v105 = vld [vmem:[%s2 + $0x58] sm:$0xff]
  %v106 = vld [vmem:[%s2 + $0x78] sm:$0xff]
  %v107 = vld [vmem:[%s2 + $0x80] sm:$0xff]
  %v108 = vld [vmem:[%s2 + $0x10] sm:$0xff]
  %v109 = vld [vmem:[%s2 + $0x18] sm:$0xff]
  %v110 = vld [vmem:[%s2 + $0x20] sm:$0xff]
  %v111 = vld [vmem:[%s2 + $0x38] sm:$0xff]
  %v112 = vld [vmem:[%s2 + $0x40] sm:$0xff]
  %v113 = vld [vmem:[%s2 + $0x48] sm:$0xff]
  %v114 = vld [vmem:[%s2 + $0x60] sm:$0xff]
  %v115 = vld [vmem:[%s2 + $0x68] sm:$0xff]
  %v116 = vld [vmem:[%s2 + $0x70] sm:$0xff]
  %v117 = vld [vmem:[%s2 + $0x88] sm:$0xff]
  %v118 = vld [vmem:[%s2 + $0x90] sm:$0xff]
  %v119 = vld [vmem:[%s2 + $0x98] sm:$0xff]
  %v120 = vld [vmem:[%s3 + $0x1] sm:$0x1]
  %v121 = vlaneseq
  %v122 = vshrl.u32 %v121, 7
  %v123 = vsub.s32 0, %v122
  %v124 = vrot.slane %v120, %v123
  %v125 = vld [vmem:[%s3 + $0x2] sm:$0x1]
  %v126 = vlaneseq
  %v127 = vshrl.u32 %v126, 7
  %v128 = vsub.s32 0, %v127
  %v129 = vrot.slane %v125, %v128
  %v130 = vld [vmem:[%s3 + $0x3] sm:$0x1]
  %v131 = vlaneseq
  %v132 = vshrl.u32 %v131, 7
  %v133 = vsub.s32 0, %v132
  %v134 = vrot.slane %v130, %v133
  %v135 = vld [vmem:[%s3 + $0x4] sm:$0x1]
  %v136 = vlaneseq
  %v137 = vshrl.u32 %v136, 7
  %v138 = vsub.s32 0, %v137
  %v139 = vrot.slane %v135, %v138
  %v140 = vld [vmem:[%s3 + $0x5] sm:$0x1]
  %v141 = vlaneseq
  %v142 = vshrl.u32 %v141, 7
  %v143 = vsub.s32 0, %v142
  %v144 = vrot.slane %v140, %v143
  loop: start=0, step=1, limit=4
  $region18: #{decoder_forward.1} parent=0 // loop_pre_header
    _
  $region19: #{decoder_forward.1} parent=0 // loop_header
    %s146 = sphi 0, %s150
    %p147 = scmp.ge.s32.totalorder %s146, 4
    %v151 = vphi %v129, %v1001
    %v152 = vphi %v134, %v925
    %v153 = vphi %v139, %v1004
    %v154 = vphi %v144, %v1008
  $region20: #{decoder_forward.1} parent=0 // loop_header_branch
    %149 = sbr.rel (%p147) target = $region24
  $region21: #{decoder_forward.1} parent=0 // loop_body
    %s155 = smul.u32 %s146, 2
    %s156 = scalar_lea.vmem [#allocation2], %s155
    %v157 = vld [vmem:[%s156] sm:$0x3]
    %v158 = vadd.f32 %v157, %v151
    %v159 = vxor.u32 %v158, 2147483648
    %v160 = vmul.f32 %v159, 1.442695
    %v161 = vpow.pop %v160
    %v162 = vadd.f32 %v161, 1.0
    %v163 = vrcp.pop %v162
    %v164 = vmul.f32 1.0, %v163
    %v165 = vtanh.pop %v158
    %167 = vrot.lane.b32.xlu0 %v153, 32
    %v168 = vpop.permute.xlu0 %167
    %v170 = vmul.f32 %v164, %v168
    %172 = vrot.lane.b32.xlu0 %v165, 64
    %v173 = vpop.permute.xlu0 %172
    %v175 = vmul.f32 %v164, %v173
    %177 = vrot.lane.b32.xlu0 %v175, 32
    %v178 = vpop.permute.xlu0 %177
    %v180 = vadd.f32 %v170, %v178
    %v181 = vtanh.pop %v180
    %183 = vrot.lane.b32.xlu0 %v181, 64
    %v184 = vpop.permute.xlu0 %183
    %v186 = vmul.f32 %v164, %v184
    %188 = vrot.lane.b32.xlu0 %v186, 32
    %v189 = vpop.permute.xlu0 %188
    %vm190 = vcmask 261120
    %v191 = vsel %vm190, %v189, 0
    %193 = vmatprep.subr.mxu0 0.0
    %194 = vmatpush1.msra.mxu0 0.0
    %195 = vmatprep.subr.mxu0 0.0
    %196 = vmatpush1.msra.mxu0 0.0
    %197 = vmatprep.subr.mxu0 0.0
    %198 = vmatpush1.msra.mxu0 0.0
    %199 = vmatprep.subr.mxu0 0.0
    %200 = vmatpush1.msra.mxu0 0.0
    %201 = vmatprep.subr.mxu0 0.0
    %202 = vmatpush1.msra.mxu0 0.0
    %203 = vmatprep.subr.mxu0 0.0
    %204 = vmatpush1.msra.mxu0 0.0
    %205 = vmatprep.subr.mxu0 0.0
    %206 = vmatpush1.msra.mxu0 0.0
    %207 = vmatprep.subr.mxu0 0.0
    %208 = vmatpush1.msra.mxu0 0.0
    %209 = vmatprep.subr.mxu0 0.0
    %210 = vmatpush1.msra.mxu0 0.0
    %211 = vmatprep.subr.mxu0 0.0
    %212 = vmatpush1.msra.mxu0 0.0
    %213 = vmatprep.subr.mxu0 0.0
    %214 = vmatpush1.msra.mxu0 0.0
    %215 = vmatprep.subr.mxu0 0.0
    %216 = vmatpush1.msra.mxu0 0.0
    %217 = vmatprep.subr.mxu0 %v107
    %218 = vmatpush1.msra.mxu0 %v106
    %219 = vmatprep.subr.mxu0 %v105
    %220 = vmatpush1.msra.mxu0 %v104
    %221 = vmatprep.subr.mxu0 %v103
    %222 = vmatpush1.msra.mxu0 %v102
    %223 = vmatprep.subr.mxu0 %v101
    %224 = vmatpush1.msra.mxu0 %v100
    %225 = vmatprep.subr.mxu0 0.0
    %226 = vmatpush2.msra.mxu0 0.0
    %227 = vmatprep.subr.mxu0 0.0
    %228 = vmatpush2.msra.mxu0 0.0
    %229 = vmatprep.subr.mxu0 0.0
    %230 = vmatpush2.msra.mxu0 0.0
    %231 = vmatprep.subr.mxu0 0.0
    %232 = vmatpush2.msra.mxu0 0.0
    %233 = vmatprep.subr.mxu0 0.0
    %234 = vmatpush2.msra.mxu0 0.0
    %235 = vmatprep.subr.mxu0 0.0
    %236 = vmatpush2.msra.mxu0 0.0
    %237 = vmatprep.subr.mxu0 0.0
    %238 = vmatpush2.msra.mxu0 0.0
    %239 = vmatprep.subr.mxu0 0.0
    %240 = vmatpush2.msra.mxu0 0.0
    %241 = vmatprep.subr.mxu0 0.0
    %242 = vmatpush2.msra.mxu0 0.0
    %243 = vmatprep.subr.mxu0 0.0
    %244 = vmatpush2.msra.mxu0 0.0
    %245 = vmatprep.subr.mxu0 0.0
    %246 = vmatpush2.msra.mxu0 0.0
    %247 = vmatprep.subr.mxu0 0.0
    %248 = vmatpush2.msra.mxu0 0.0
    %249 = vmatprep.subr.mxu0 0.0
    %250 = vmatpush2.msra.mxu0 0.0
    %251 = vmatprep.subr.mxu0 0.0
    %252 = vmatpush2.msra.mxu0 0.0
    %253 = vmatprep.subr.mxu0 0.0
    %254 = vmatpush2.msra.mxu0 0.0
    %255 = vmatprep.subr.mxu0 0.0
    %256 = vmatpush2.msra.mxu0 0.0
    %257 = vmatprep.mubr.f32.mxu0 0.0
    %258 = vmatmul.mubr.f32.gmra.mxu0 %v191
    %v259 = vpop.f32.mrf.mxu0
    %v260 = vadd.f32 0.0, %v259
    %v261 = vpop.f32.mrf.mxu0
    %v262 = vadd.f32 0.0, %v261
    %263 = vdwg.mxu0
    %v264 = vadd.f32 %v260, %v152
    %v265 = vadd.f32 %v264, %v124
    %v266 = vxor.u32 %v265, 2147483648
    %v267 = vmul.f32 %v266, 1.442695
    %v268 = vpow.pop %v267
    %v269 = vadd.f32 %v268, 1.0
    %v270 = vrcp.pop %v269
    %v271 = vmul.f32 1.0, %v270
    %v272 = vtanh.pop %v265
    %274 = vrot.lane.b32.xlu0 %v154, 32
    %v275 = vpop.permute.xlu0 %274
    %v277 = vmul.f32 %v271, %v275
    %279 = vrot.lane.b32.xlu0 %v272, 64
    %v280 = vpop.permute.xlu0 %279
    %v282 = vmul.f32 %v271, %v280
    %284 = vrot.lane.b32.xlu0 %v282, 32
    %v285 = vpop.permute.xlu0 %284
    %v287 = vadd.f32 %v277, %v285
    %v288 = vtanh.pop %v287
    %290 = vrot.lane.b32.xlu0 %v288, 64
    %v291 = vpop.permute.xlu0 %290
    %v293 = vmul.f32 %v271, %v291
    %295 = vrot.lane.b32.xlu0 %v293, 32
    %v296 = vpop.permute.xlu0 %295
    %v297 = vsel %vm190, %v296, 0
    %299 = vmatprep.subr.mxu0 0.0
    %300 = vmatpush1.msra.mxu0 0.0
    %301 = vmatprep.subr.mxu0 0.0
    %302 = vmatpush1.msra.mxu0 0.0
    %303 = vmatprep.subr.mxu0 0.0
    %304 = vmatpush1.msra.mxu0 0.0
    %305 = vmatprep.subr.mxu0 0.0
    %306 = vmatpush1.msra.mxu0 0.0
    %307 = vmatprep.subr.mxu0 0.0
    %308 = vmatpush1.msra.mxu0 0.0
    %309 = vmatprep.subr.mxu0 0.0
    %310 = vmatpush1.msra.mxu0 0.0
    %311 = vmatprep.subr.mxu0 0.0
    %312 = vmatpush1.msra.mxu0 0.0
    %313 = vmatprep.subr.mxu0 0.0
    %314 = vmatpush1.msra.mxu0 0.0
    %315 = vmatprep.subr.mxu0 0.0
    %316 = vmatpush1.msra.mxu0 0.0
    %317 = vmatprep.subr.mxu0 0.0
    %318 = vmatpush1.msra.mxu0 0.0
    %319 = vmatprep.subr.mxu0 0.0
    %320 = vmatpush1.msra.mxu0 0.0
    %321 = vmatprep.subr.mxu0 0.0
    %322 = vmatpush1.msra.mxu0 0.0
    %323 = vmatprep.subr.mxu0 %v118
    %324 = vmatpush1.msra.mxu0 %v117
    %325 = vmatprep.subr.mxu0 %v115
    %326 = vmatpush1.msra.mxu0 %v114
    %327 = vmatprep.subr.mxu0 %v112
    %328 = vmatpush1.msra.mxu0 %v111
    %329 = vmatprep.subr.mxu0 %v109
    %330 = vmatpush1.msra.mxu0 %v108
    %331 = vmatprep.subr.mxu0 0.0
    %332 = vmatpush2.msra.mxu0 0.0
    %333 = vmatprep.subr.mxu0 0.0
    %334 = vmatpush2.msra.mxu0 0.0
    %335 = vmatprep.subr.mxu0 0.0
    %336 = vmatpush2.msra.mxu0 0.0
    %337 = vmatprep.subr.mxu0 0.0
    %338 = vmatpush2.msra.mxu0 0.0
    %339 = vmatprep.subr.mxu0 0.0
    %340 = vmatpush2.msra.mxu0 0.0
    %341 = vmatprep.subr.mxu0 0.0
    %342 = vmatpush2.msra.mxu0 0.0
    %343 = vmatprep.subr.mxu0 0.0
    %344 = vmatpush2.msra.mxu0 0.0
    %345 = vmatprep.subr.mxu0 0.0
    %346 = vmatpush2.msra.mxu0 0.0
    %347 = vmatprep.subr.mxu0 0.0
    %348 = vmatpush2.msra.mxu0 0.0
    %349 = vmatprep.subr.mxu0 0.0
    %350 = vmatpush2.msra.mxu0 0.0
    %351 = vmatprep.subr.mxu0 0.0
    %352 = vmatpush2.msra.mxu0 0.0
    %353 = vmatprep.subr.mxu0 0.0
    %354 = vmatpush2.msra.mxu0 0.0
    %355 = vmatprep.subr.mxu0 0.0
    %356 = vmatpush2.msra.mxu0 0.0
    %357 = vmatprep.subr.mxu0 0.0
    %358 = vmatpush2.msra.mxu0 0.0
    %359 = vmatprep.subr.mxu0 0.0
    %360 = vmatpush2.msra.mxu0 0.0
    %361 = vmatprep.subr.mxu0 0.0
    %362 = vmatpush2.msra.mxu0 0.0
    %363 = vmatprep.mubr.f32.mxu0 0.0
    %364 = vmatmul.mubr.f32.gmra.mxu0 %v297
    %v365 = vpop.f32.mrf.mxu0
    %v366 = vadd.f32 0.0, %v365
    %v367 = vpop.f32.mrf.mxu0
    %v368 = vadd.f32 0.0, %v367
    %369 = vdwg.mxu0
    %370 = vmatprep.subr.mxu0 0.0
    %371 = vmatpush1.msra.mxu0 0.0
    %372 = vmatprep.subr.mxu0 0.0
    %373 = vmatpush1.msra.mxu0 0.0
    %374 = vmatprep.subr.mxu0 0.0
    %375 = vmatpush1.msra.mxu0 0.0
    %376 = vmatprep.subr.mxu0 0.0
    %377 = vmatpush1.msra.mxu0 0.0
    %378 = vmatprep.subr.mxu0 0.0
    %379 = vmatpush1.msra.mxu0 0.0
    %380 = vmatprep.subr.mxu0 0.0
    %381 = vmatpush1.msra.mxu0 0.0
    %382 = vmatprep.subr.mxu0 0.0
    %383 = vmatpush1.msra.mxu0 0.0
    %384 = vmatprep.subr.mxu0 0.0
    %385 = vmatpush1.msra.mxu0 0.0
    %386 = vmatprep.subr.mxu0 0.0
    %387 = vmatpush1.msra.mxu0 0.0
    %388 = vmatprep.subr.mxu0 0.0
    %389 = vmatpush1.msra.mxu0 0.0
    %390 = vmatprep.subr.mxu0 0.0
    %391 = vmatpush1.msra.mxu0 0.0
    %392 = vmatprep.subr.mxu0 0.0
    %393 = vmatpush1.msra.mxu0 0.0
    %394 = vmatprep.subr.mxu0 0.0
    %395 = vmatpush1.msra.mxu0 %v119
    %396 = vmatprep.subr.mxu0 0.0
    %397 = vmatpush1.msra.mxu0 %v116
    %398 = vmatprep.subr.mxu0 0.0
    %399 = vmatpush1.msra.mxu0 %v113
    %400 = vmatprep.subr.mxu0 0.0
    %401 = vmatpush1.msra.mxu0 %v110
    %402 = vmatprep.subr.mxu0 0.0
    %403 = vmatpush2.msra.mxu0 0.0
    %404 = vmatprep.subr.mxu0 0.0
    %405 = vmatpush2.msra.mxu0 0.0
    %406 = vmatprep.subr.mxu0 0.0
    %407 = vmatpush2.msra.mxu0 0.0
    %408 = vmatprep.subr.mxu0 0.0
    %409 = vmatpush2.msra.mxu0 0.0
    %410 = vmatprep.subr.mxu0 0.0
    %411 = vmatpush2.msra.mxu0 0.0
    %412 = vmatprep.subr.mxu0 0.0
    %413 = vmatpush2.msra.mxu0 0.0
    %414 = vmatprep.subr.mxu0 0.0
    %415 = vmatpush2.msra.mxu0 0.0
    %416 = vmatprep.subr.mxu0 0.0
    %417 = vmatpush2.msra.mxu0 0.0
    %418 = vmatprep.subr.mxu0 0.0
    %419 = vmatpush2.msra.mxu0 0.0
    %420 = vmatprep.subr.mxu0 0.0
    %421 = vmatpush2.msra.mxu0 0.0
    %422 = vmatprep.subr.mxu0 0.0
    %423 = vmatpush2.msra.mxu0 0.0
    %424 = vmatprep.subr.mxu0 0.0
    %425 = vmatpush2.msra.mxu0 0.0
    %426 = vmatprep.subr.mxu0 0.0
    %427 = vmatpush2.msra.mxu0 0.0
    %428 = vmatprep.subr.mxu0 0.0
    %429 = vmatpush2.msra.mxu0 0.0
    %430 = vmatprep.subr.mxu0 0.0
    %431 = vmatpush2.msra.mxu0 0.0
    %432 = vmatprep.subr.mxu0 0.0
    %433 = vmatpush2.msra.mxu0 0.0
    %434 = vmatprep.mubr.f32.mxu0 0.0
    %435 = vmatmul.mubr.f32.gmra.mxu0 %v297
    %v436 = vpop.f32.mrf.mxu0
    %v437 = vadd.f32 0.0, %v436
    %v438 = vpop.f32.mrf.mxu0
    %439 = vdwg.mxu0
    %s440 = smul.u32 %s146, 6
    %s441 = scalar_lea.vmem %s4, %s440
    %vm442 = vcmask 58368
    %443 = vst.msk [vmem:[%s441] sm:$0x3] %vm442, %v437
    %v444 = vadd.f32 %v366, %v262
    %v445 = vadd.f32 %v157, %v444
    %v446 = vxor.u32 %v445, 2147483648
    %v447 = vmul.f32 %v446, 1.442695
    %v448 = vpow.pop %v447
    %v449 = vadd.f32 %v448, 1.0
    %v450 = vrcp.pop %v449
    %v451 = vmul.f32 1.0, %v450
    %v452 = vtanh.pop %v445
    %v453 = vmul.f32 %v451, %v180
    %455 = vrot.lane.b32.xlu0 %v452, 64
    %v456 = vpop.permute.xlu0 %455
    %v458 = vmul.f32 %v451, %v456
    %460 = vrot.lane.b32.xlu0 %v458, 32
    %v461 = vpop.permute.xlu0 %460
    %v463 = vadd.f32 %v453, %v461
    %v464 = vtanh.pop %v463
    %466 = vrot.lane.b32.xlu0 %v464, 64
    %v467 = vpop.permute.xlu0 %466
    %v469 = vmul.f32 %v451, %v467
    %471 = vrot.lane.b32.xlu0 %v469, 32
    %v472 = vpop.permute.xlu0 %471
    %v473 = vsel %vm190, %v472, 0
    %475 = vmatprep.subr.mxu0 0.0
    %476 = vmatpush1.msra.mxu0 0.0
    %477 = vmatprep.subr.mxu0 0.0
    %478 = vmatpush1.msra.mxu0 0.0
    %479 = vmatprep.subr.mxu0 0.0
    %480 = vmatpush1.msra.mxu0 0.0
    %481 = vmatprep.subr.mxu0 0.0
    %482 = vmatpush1.msra.mxu0 0.0
    %483 = vmatprep.subr.mxu0 0.0
    %484 = vmatpush1.msra.mxu0 0.0
    %485 = vmatprep.subr.mxu0 0.0
    %486 = vmatpush1.msra.mxu0 0.0
    %487 = vmatprep.subr.mxu0 0.0
    %488 = vmatpush1.msra.mxu0 0.0
    %489 = vmatprep.subr.mxu0 0.0
    %490 = vmatpush1.msra.mxu0 0.0
    %491 = vmatprep.subr.mxu0 0.0
    %492 = vmatpush1.msra.mxu0 0.0
    %493 = vmatprep.subr.mxu0 0.0
    %494 = vmatpush1.msra.mxu0 0.0
    %495 = vmatprep.subr.mxu0 0.0
    %496 = vmatpush1.msra.mxu0 0.0
    %497 = vmatprep.subr.mxu0 0.0
    %498 = vmatpush1.msra.mxu0 0.0
    %499 = vmatprep.subr.mxu0 %v107
    %500 = vmatpush1.msra.mxu0 %v106
    %501 = vmatprep.subr.mxu0 %v105
    %502 = vmatpush1.msra.mxu0 %v104
    %503 = vmatprep.subr.mxu0 %v103
    %504 = vmatpush1.msra.mxu0 %v102
    %505 = vmatprep.subr.mxu0 %v101
    %506 = vmatpush1.msra.mxu0 %v100
    %507 = vmatprep.subr.mxu0 0.0
    %508 = vmatpush2.msra.mxu0 0.0
    %509 = vmatprep.subr.mxu0 0.0
    %510 = vmatpush2.msra.mxu0 0.0
    %511 = vmatprep.subr.mxu0 0.0
    %512 = vmatpush2.msra.mxu0 0.0
    %513 = vmatprep.subr.mxu0 0.0
    %514 = vmatpush2.msra.mxu0 0.0
    %515 = vmatprep.subr.mxu0 0.0
    %516 = vmatpush2.msra.mxu0 0.0
    %517 = vmatprep.subr.mxu0 0.0
    %518 = vmatpush2.msra.mxu0 0.0
    %519 = vmatprep.subr.mxu0 0.0
    %520 = vmatpush2.msra.mxu0 0.0
    %521 = vmatprep.subr.mxu0 0.0
    %522 = vmatpush2.msra.mxu0 0.0
    %523 = vmatprep.subr.mxu0 0.0
    %524 = vmatpush2.msra.mxu0 0.0
    %525 = vmatprep.subr.mxu0 0.0
    %526 = vmatpush2.msra.mxu0 0.0
    %527 = vmatprep.subr.mxu0 0.0
    %528 = vmatpush2.msra.mxu0 0.0
    %529 = vmatprep.subr.mxu0 0.0
    %530 = vmatpush2.msra.mxu0 0.0
    %531 = vmatprep.subr.mxu0 0.0
    %532 = vmatpush2.msra.mxu0 0.0
    %533 = vmatprep.subr.mxu0 0.0
    %534 = vmatpush2.msra.mxu0 0.0
    %535 = vmatprep.subr.mxu0 0.0
    %536 = vmatpush2.msra.mxu0 0.0
    %537 = vmatprep.subr.mxu0 0.0
    %538 = vmatpush2.msra.mxu0 0.0
    %539 = vmatprep.mubr.f32.mxu0 0.0
    %540 = vmatmul.mubr.f32.gmra.mxu0 %v473
    %v541 = vpop.f32.mrf.mxu0
    %v542 = vadd.f32 0.0, %v541
    %v543 = vpop.f32.mrf.mxu0
    %v544 = vadd.f32 0.0, %v543
    %545 = vdwg.mxu0
    %v546 = vadd.f32 %v542, %v368
    %v547 = vadd.f32 %v546, %v124
    %v548 = vxor.u32 %v547, 2147483648
    %v549 = vmul.f32 %v548, 1.442695
    %v550 = vpow.pop %v549
    %v551 = vadd.f32 %v550, 1.0
    %v552 = vrcp.pop %v551
    %v553 = vmul.f32 1.0, %v552
    %v554 = vtanh.pop %v547
    %v555 = vmul.f32 %v553, %v287
    %557 = vrot.lane.b32.xlu0 %v554, 64
    %v558 = vpop.permute.xlu0 %557
    %v560 = vmul.f32 %v553, %v558
    %562 = vrot.lane.b32.xlu0 %v560, 32
    %v563 = vpop.permute.xlu0 %562
    %v565 = vadd.f32 %v555, %v563
    %v566 = vtanh.pop %v565
    %568 = vrot.lane.b32.xlu0 %v566, 64
    %v569 = vpop.permute.xlu0 %568
    %v571 = vmul.f32 %v553, %v569
    %573 = vrot.lane.b32.xlu0 %v571, 32
    %v574 = vpop.permute.xlu0 %573
    %v575 = vsel %vm190, %v574, 0
    %577 = vmatprep.subr.mxu0 0.0
    %578 = vmatpush1.msra.mxu0 0.0
    %579 = vmatprep.subr.mxu0 0.0
    %580 = vmatpush1.msra.mxu0 0.0
    %581 = vmatprep.subr.mxu0 0.0
    %582 = vmatpush1.msra.mxu0 0.0
    %583 = vmatprep.subr.mxu0 0.0
    %584 = vmatpush1.msra.mxu0 0.0
    %585 = vmatprep.subr.mxu0 0.0
    %586 = vmatpush1.msra.mxu0 0.0
    %587 = vmatprep.subr.mxu0 0.0
    %588 = vmatpush1.msra.mxu0 0.0
    %589 = vmatprep.subr.mxu0 0.0
    %590 = vmatpush1.msra.mxu0 0.0
    %591 = vmatprep.subr.mxu0 0.0
    %592 = vmatpush1.msra.mxu0 0.0
    %593 = vmatprep.subr.mxu0 0.0
    %594 = vmatpush1.msra.mxu0 0.0
    %595 = vmatprep.subr.mxu0 0.0
    %596 = vmatpush1.msra.mxu0 0.0
    %597 = vmatprep.subr.mxu0 0.0
    %598 = vmatpush1.msra.mxu0 0.0
    %599 = vmatprep.subr.mxu0 0.0
    %600 = vmatpush1.msra.mxu0 0.0
    %601 = vmatprep.subr.mxu0 %v118
    %602 = vmatpush1.msra.mxu0 %v117
    %603 = vmatprep.subr.mxu0 %v115
    %604 = vmatpush1.msra.mxu0 %v114
    %605 = vmatprep.subr.mxu0 %v112
    %606 = vmatpush1.msra.mxu0 %v111
    %607 = vmatprep.subr.mxu0 %v109
    %608 = vmatpush1.msra.mxu0 %v108
    %609 = vmatprep.subr.mxu0 0.0
    %610 = vmatpush2.msra.mxu0 0.0
    %611 = vmatprep.subr.mxu0 0.0
    %612 = vmatpush2.msra.mxu0 0.0
    %613 = vmatprep.subr.mxu0 0.0
    %614 = vmatpush2.msra.mxu0 0.0
    %615 = vmatprep.subr.mxu0 0.0
    %616 = vmatpush2.msra.mxu0 0.0
    %617 = vmatprep.subr.mxu0 0.0
    %618 = vmatpush2.msra.mxu0 0.0
    %619 = vmatprep.subr.mxu0 0.0
    %620 = vmatpush2.msra.mxu0 0.0
    %621 = vmatprep.subr.mxu0 0.0
    %622 = vmatpush2.msra.mxu0 0.0
    %623 = vmatprep.subr.mxu0 0.0
    %624 = vmatpush2.msra.mxu0 0.0
    %625 = vmatprep.subr.mxu0 0.0
    %626 = vmatpush2.msra.mxu0 0.0
    %627 = vmatprep.subr.mxu0 0.0
    %628 = vmatpush2.msra.mxu0 0.0
    %629 = vmatprep.subr.mxu0 0.0
    %630 = vmatpush2.msra.mxu0 0.0
    %631 = vmatprep.subr.mxu0 0.0
    %632 = vmatpush2.msra.mxu0 0.0
    %633 = vmatprep.subr.mxu0 0.0
    %634 = vmatpush2.msra.mxu0 0.0
    %635 = vmatprep.subr.mxu0 0.0
    %636 = vmatpush2.msra.mxu0 0.0
    %637 = vmatprep.subr.mxu0 0.0
    %638 = vmatpush2.msra.mxu0 0.0
    %639 = vmatprep.subr.mxu0 0.0
    %640 = vmatpush2.msra.mxu0 0.0
    %641 = vmatprep.mubr.f32.mxu0 0.0
    %642 = vmatmul.mubr.f32.gmra.mxu0 %v575
    %v643 = vpop.f32.mrf.mxu0
    %v644 = vadd.f32 0.0, %v643
    %v645 = vpop.f32.mrf.mxu0
    %v646 = vadd.f32 0.0, %v645
    %647 = vdwg.mxu0
    %648 = vmatprep.subr.mxu0 0.0
    %649 = vmatpush1.msra.mxu0 0.0
    %650 = vmatprep.subr.mxu0 0.0
    %651 = vmatpush1.msra.mxu0 0.0
    %652 = vmatprep.subr.mxu0 0.0
    %653 = vmatpush1.msra.mxu0 0.0
    %654 = vmatprep.subr.mxu0 0.0
    %655 = vmatpush1.msra.mxu0 0.0
    %656 = vmatprep.subr.mxu0 0.0
    %657 = vmatpush1.msra.mxu0 0.0
    %658 = vmatprep.subr.mxu0 0.0
    %659 = vmatpush1.msra.mxu0 0.0
    %660 = vmatprep.subr.mxu0 0.0
    %661 = vmatpush1.msra.mxu0 0.0
    %662 = vmatprep.subr.mxu0 0.0
    %663 = vmatpush1.msra.mxu0 0.0
    %664 = vmatprep.subr.mxu0 0.0
    %665 = vmatpush1.msra.mxu0 0.0
    %666 = vmatprep.subr.mxu0 0.0
    %667 = vmatpush1.msra.mxu0 0.0
    %668 = vmatprep.subr.mxu0 0.0
    %669 = vmatpush1.msra.mxu0 0.0
    %670 = vmatprep.subr.mxu0 0.0
    %671 = vmatpush1.msra.mxu0 0.0
    %672 = vmatprep.subr.mxu0 0.0
    %673 = vmatpush1.msra.mxu0 %v119
    %674 = vmatprep.subr.mxu0 0.0
    %675 = vmatpush1.msra.mxu0 %v116
    %676 = vmatprep.subr.mxu0 0.0
    %677 = vmatpush1.msra.mxu0 %v113
    %678 = vmatprep.subr.mxu0 0.0
    %679 = vmatpush1.msra.mxu0 %v110
    %680 = vmatprep.subr.mxu0 0.0
    %681 = vmatpush2.msra.mxu0 0.0
    %682 = vmatprep.subr.mxu0 0.0
    %683 = vmatpush2.msra.mxu0 0.0
    %684 = vmatprep.subr.mxu0 0.0
    %685 = vmatpush2.msra.mxu0 0.0
    %686 = vmatprep.subr.mxu0 0.0
    %687 = vmatpush2.msra.mxu0 0.0
    %688 = vmatprep.subr.mxu0 0.0
    %689 = vmatpush2.msra.mxu0 0.0
    %690 = vmatprep.subr.mxu0 0.0
    %691 = vmatpush2.msra.mxu0 0.0
    %692 = vmatprep.subr.mxu0 0.0
    %693 = vmatpush2.msra.mxu0 0.0
    %694 = vmatprep.subr.mxu0 0.0
    %695 = vmatpush2.msra.mxu0 0.0
    %696 = vmatprep.subr.mxu0 0.0
    %697 = vmatpush2.msra.mxu0 0.0
    %698 = vmatprep.subr.mxu0 0.0
    %699 = vmatpush2.msra.mxu0 0.0
    %700 = vmatprep.subr.mxu0 0.0
    %701 = vmatpush2.msra.mxu0 0.0
    %702 = vmatprep.subr.mxu0 0.0
    %703 = vmatpush2.msra.mxu0 0.0
    %704 = vmatprep.subr.mxu0 0.0
    %705 = vmatpush2.msra.mxu0 0.0
    %706 = vmatprep.subr.mxu0 0.0
    %707 = vmatpush2.msra.mxu0 0.0
    %708 = vmatprep.subr.mxu0 0.0
    %709 = vmatpush2.msra.mxu0 0.0
    %710 = vmatprep.subr.mxu0 0.0
    %711 = vmatpush2.msra.mxu0 0.0
    %712 = vmatprep.mubr.f32.mxu0 0.0
    %713 = vmatmul.mubr.f32.gmra.mxu0 %v575
    %v714 = vpop.f32.mrf.mxu0
    %v715 = vadd.f32 0.0, %v714
    %v716 = vpop.f32.mrf.mxu0
    %717 = vdwg.mxu0
    %s718 = smul.u32 %s146, 3
    %s719 = sadd.s32 %s718, 1
    %s720 = smul.u32 %s719, 2
    %s721 = scalar_lea.vmem %s4, %s720
    %722 = vst.msk [vmem:[%s721] sm:$0x3] %vm442, %v715
    %v723 = vadd.f32 %v644, %v544
    %v724 = vadd.f32 %v157, %v723
    %v725 = vxor.u32 %v724, 2147483648
    %v726 = vmul.f32 %v725, 1.442695
    %v727 = vpow.pop %v726
    %v728 = vadd.f32 %v727, 1.0
    %v729 = vrcp.pop %v728
    %v730 = vmul.f32 1.0, %v729
    %v731 = vtanh.pop %v724
    %v732 = vmul.f32 %v730, %v463
    %734 = vrot.lane.b32.xlu0 %v731, 64
    %v735 = vpop.permute.xlu0 %734
    %v737 = vmul.f32 %v730, %v735
    %739 = vrot.lane.b32.xlu0 %v737, 32
    %v740 = vpop.permute.xlu0 %739
    %v742 = vadd.f32 %v732, %v740
    %v743 = vtanh.pop %v742
    %745 = vrot.lane.b32.xlu0 %v743, 64
    %v746 = vpop.permute.xlu0 %745
    %v748 = vmul.f32 %v730, %v746
    %750 = vrot.lane.b32.xlu0 %v748, 32
    %v751 = vpop.permute.xlu0 %750
    %v752 = vsel %vm190, %v751, 0
    %754 = vmatprep.subr.mxu0 0.0
    %755 = vmatpush1.msra.mxu0 0.0
    %756 = vmatprep.subr.mxu0 0.0
    %757 = vmatpush1.msra.mxu0 0.0
    %758 = vmatprep.subr.mxu0 0.0
    %759 = vmatpush1.msra.mxu0 0.0
    %760 = vmatprep.subr.mxu0 0.0
    %761 = vmatpush1.msra.mxu0 0.0
    %762 = vmatprep.subr.mxu0 0.0
    %763 = vmatpush1.msra.mxu0 0.0
    %764 = vmatprep.subr.mxu0 0.0
    %765 = vmatpush1.msra.mxu0 0.0
    %766 = vmatprep.subr.mxu0 0.0
    %767 = vmatpush1.msra.mxu0 0.0
    %768 = vmatprep.subr.mxu0 0.0
    %769 = vmatpush1.msra.mxu0 0.0
    %770 = vmatprep.subr.mxu0 0.0
    %771 = vmatpush1.msra.mxu0 0.0
    %772 = vmatprep.subr.mxu0 0.0
    %773 = vmatpush1.msra.mxu0 0.0
    %774 = vmatprep.subr.mxu0 0.0
    %775 = vmatpush1.msra.mxu0 0.0
    %776 = vmatprep.subr.mxu0 0.0
    %777 = vmatpush1.msra.mxu0 0.0
    %778 = vmatprep.subr.mxu0 %v107
    %779 = vmatpush1.msra.mxu0 %v106
    %780 = vmatprep.subr.mxu0 %v105
    %781 = vmatpush1.msra.mxu0 %v104
    %782 = vmatprep.subr.mxu0 %v103
    %783 = vmatpush1.msra.mxu0 %v102
    %784 = vmatprep.subr.mxu0 %v101
    %785 = vmatpush1.msra.mxu0 %v100
    %786 = vmatprep.subr.mxu0 0.0
    %787 = vmatpush2.msra.mxu0 0.0
    %788 = vmatprep.subr.mxu0 0.0
    %789 = vmatpush2.msra.mxu0 0.0
    %790 = vmatprep.subr.mxu0 0.0
    %791 = vmatpush2.msra.mxu0 0.0
    %792 = vmatprep.subr.mxu0 0.0
    %793 = vmatpush2.msra.mxu0 0.0
    %794 = vmatprep.subr.mxu0 0.0
    %795 = vmatpush2.msra.mxu0 0.0
    %796 = vmatprep.subr.mxu0 0.0
    %797 = vmatpush2.msra.mxu0 0.0
    %798 = vmatprep.subr.mxu0 0.0
    %799 = vmatpush2.msra.mxu0 0.0
    %800 = vmatprep.subr.mxu0 0.0
    %801 = vmatpush2.msra.mxu0 0.0
    %802 = vmatprep.subr.mxu0 0.0
    %803 = vmatpush2.msra.mxu0 0.0
    %804 = vmatprep.subr.mxu0 0.0
    %805 = vmatpush2.msra.mxu0 0.0
    %806 = vmatprep.subr.mxu0 0.0
    %807 = vmatpush2.msra.mxu0 0.0
    %808 = vmatprep.subr.mxu0 0.0
    %809 = vmatpush2.msra.mxu0 0.0
    %810 = vmatprep.subr.mxu0 0.0
    %811 = vmatpush2.msra.mxu0 0.0
    %812 = vmatprep.subr.mxu0 0.0
    %813 = vmatpush2.msra.mxu0 0.0
    %814 = vmatprep.subr.mxu0 0.0
    %815 = vmatpush2.msra.mxu0 0.0
    %816 = vmatprep.subr.mxu0 0.0
    %817 = vmatpush2.msra.mxu0 0.0
    %818 = vmatprep.mubr.f32.mxu0 0.0
    %819 = vmatmul.mubr.f32.gmra.mxu0 %v752
    %v820 = vpop.f32.mrf.mxu0
    %v821 = vadd.f32 0.0, %v820
    %v822 = vpop.f32.mrf.mxu0
    %v823 = vadd.f32 0.0, %v822
    %824 = vdwg.mxu0
    %v825 = vadd.f32 %v821, %v646
    %v826 = vadd.f32 %v825, %v124
    %v827 = vxor.u32 %v826, 2147483648
    %v828 = vmul.f32 %v827, 1.442695
    %v829 = vpow.pop %v828
    %v830 = vadd.f32 %v829, 1.0
    %v831 = vrcp.pop %v830
    %v832 = vmul.f32 1.0, %v831
    %v833 = vtanh.pop %v826
    %v834 = vmul.f32 %v832, %v565
    %836 = vrot.lane.b32.xlu0 %v833, 64
    %v837 = vpop.permute.xlu0 %836
    %v839 = vmul.f32 %v832, %v837
    %841 = vrot.lane.b32.xlu0 %v839, 32
    %v842 = vpop.permute.xlu0 %841
    %v844 = vadd.f32 %v834, %v842
    %v845 = vtanh.pop %v844
    %847 = vrot.lane.b32.xlu0 %v845, 64
    %v848 = vpop.permute.xlu0 %847
    %v850 = vmul.f32 %v832, %v848
    %852 = vrot.lane.b32.xlu0 %v850, 32
    %v853 = vpop.permute.xlu0 %852
    %v854 = vsel %vm190, %v853, 0
    %856 = vmatprep.subr.mxu0 0.0
    %857 = vmatpush1.msra.mxu0 0.0
    %858 = vmatprep.subr.mxu0 0.0
    %859 = vmatpush1.msra.mxu0 0.0
    %860 = vmatprep.subr.mxu0 0.0
    %861 = vmatpush1.msra.mxu0 0.0
    %862 = vmatprep.subr.mxu0 0.0
    %863 = vmatpush1.msra.mxu0 0.0
    %864 = vmatprep.subr.mxu0 0.0
    %865 = vmatpush1.msra.mxu0 0.0
    %866 = vmatprep.subr.mxu0 0.0
    %867 = vmatpush1.msra.mxu0 0.0
    %868 = vmatprep.subr.mxu0 0.0
    %869 = vmatpush1.msra.mxu0 0.0
    %870 = vmatprep.subr.mxu0 0.0
    %871 = vmatpush1.msra.mxu0 0.0
    %872 = vmatprep.subr.mxu0 0.0
    %873 = vmatpush1.msra.mxu0 0.0
    %874 = vmatprep.subr.mxu0 0.0
    %875 = vmatpush1.msra.mxu0 0.0
    %876 = vmatprep.subr.mxu0 0.0
    %877 = vmatpush1.msra.mxu0 0.0
    %878 = vmatprep.subr.mxu0 0.0
    %879 = vmatpush1.msra.mxu0 0.0
    %880 = vmatprep.subr.mxu0 %v118
    %881 = vmatpush1.msra.mxu0 %v117
    %882 = vmatprep.subr.mxu0 %v115
    %883 = vmatpush1.msra.mxu0 %v114
    %884 = vmatprep.subr.mxu0 %v112
    %885 = vmatpush1.msra.mxu0 %v111
    %886 = vmatprep.subr.mxu0 %v109
    %887 = vmatpush1.msra.mxu0 %v108
    %888 = vmatprep.subr.mxu0 0.0
    %889 = vmatpush2.msra.mxu0 0.0
    %890 = vmatprep.subr.mxu0 0.0
    %891 = vmatpush2.msra.mxu0 0.0
    %892 = vmatprep.subr.mxu0 0.0
    %893 = vmatpush2.msra.mxu0 0.0
    %894 = vmatprep.subr.mxu0 0.0
    %895 = vmatpush2.msra.mxu0 0.0
    %896 = vmatprep.subr.mxu0 0.0
    %897 = vmatpush2.msra.mxu0 0.0
    %898 = vmatprep.subr.mxu0 0.0
    %899 = vmatpush2.msra.mxu0 0.0
    %900 = vmatprep.subr.mxu0 0.0
    %901 = vmatpush2.msra.mxu0 0.0
    %902 = vmatprep.subr.mxu0 0.0
    %903 = vmatpush2.msra.mxu0 0.0
    %904 = vmatprep.subr.mxu0 0.0
    %905 = vmatpush2.msra.mxu0 0.0
    %906 = vmatprep.subr.mxu0 0.0
    %907 = vmatpush2.msra.mxu0 0.0
    %908 = vmatprep.subr.mxu0 0.0
    %909 = vmatpush2.msra.mxu0 0.0
    %910 = vmatprep.subr.mxu0 0.0
    %911 = vmatpush2.msra.mxu0 0.0
    %912 = vmatprep.subr.mxu0 0.0
    %913 = vmatpush2.msra.mxu0 0.0
    %914 = vmatprep.subr.mxu0 0.0
    %915 = vmatpush2.msra.mxu0 0.0
    %916 = vmatprep.subr.mxu0 0.0
    %917 = vmatpush2.msra.mxu0 0.0
    %918 = vmatprep.subr.mxu0 0.0
    %919 = vmatpush2.msra.mxu0 0.0
    %920 = vmatprep.mubr.f32.mxu0 0.0
    %921 = vmatmul.mubr.f32.gmra.mxu0 %v854
    %v922 = vpop.f32.mrf.mxu0
    %v923 = vadd.f32 0.0, %v922
    %v924 = vpop.f32.mrf.mxu0
    %v925 = vadd.f32 0.0, %v924
    %926 = vdwg.mxu0
    %927 = vmatprep.subr.mxu0 0.0
    %928 = vmatpush1.msra.mxu0 0.0
    %929 = vmatprep.subr.mxu0 0.0
    %930 = vmatpush1.msra.mxu0 0.0
    %931 = vmatprep.subr.mxu0 0.0
    %932 = vmatpush1.msra.mxu0 0.0
    %933 = vmatprep.subr.mxu0 0.0
    %934 = vmatpush1.msra.mxu0 0.0
    %935 = vmatprep.subr.mxu0 0.0
    %936 = vmatpush1.msra.mxu0 0.0
    %937 = vmatprep.subr.mxu0 0.0
    %938 = vmatpush1.msra.mxu0 0.0
    %939 = vmatprep.subr.mxu0 0.0
    %940 = vmatpush1.msra.mxu0 0.0
    %941 = vmatprep.subr.mxu0 0.0
    %942 = vmatpush1.msra.mxu0 0.0
    %943 = vmatprep.subr.mxu0 0.0
    %944 = vmatpush1.msra.mxu0 0.0
    %945 = vmatprep.subr.mxu0 0.0
    %946 = vmatpush1.msra.mxu0 0.0
    %947 = vmatprep.subr.mxu0 0.0
    %948 = vmatpush1.msra.mxu0 0.0
    %949 = vmatprep.subr.mxu0 0.0
    %950 = vmatpush1.msra.mxu0 0.0
    %951 = vmatprep.subr.mxu0 0.0
    %952 = vmatpush1.msra.mxu0 %v119
    %953 = vmatprep.subr.mxu0 0.0
    %954 = vmatpush1.msra.mxu0 %v116
    %955 = vmatprep.subr.mxu0 0.0
    %956 = vmatpush1.msra.mxu0 %v113
    %957 = vmatprep.subr.mxu0 0.0
    %958 = vmatpush1.msra.mxu0 %v110
    %959 = vmatprep.subr.mxu0 0.0
    %960 = vmatpush2.msra.mxu0 0.0
    %961 = vmatprep.subr.mxu0 0.0
    %962 = vmatpush2.msra.mxu0 0.0
    %963 = vmatprep.subr.mxu0 0.0
    %964 = vmatpush2.msra.mxu0 0.0
    %965 = vmatprep.subr.mxu0 0.0
    %966 = vmatpush2.msra.mxu0 0.0
    %967 = vmatprep.subr.mxu0 0.0
    %968 = vmatpush2.msra.mxu0 0.0
    %969 = vmatprep.subr.mxu0 0.0
    %970 = vmatpush2.msra.mxu0 0.0
    %971 = vmatprep.subr.mxu0 0.0
    %972 = vmatpush2.msra.mxu0 0.0
    %973 = vmatprep.subr.mxu0 0.0
    %974 = vmatpush2.msra.mxu0 0.0
    %975 = vmatprep.subr.mxu0 0.0
    %976 = vmatpush2.msra.mxu0 0.0
    %977 = vmatprep.subr.mxu0 0.0
    %978 = vmatpush2.msra.mxu0 0.0
    %979 = vmatprep.subr.mxu0 0.0
    %980 = vmatpush2.msra.mxu0 0.0
    %981 = vmatprep.subr.mxu0 0.0
    %982 = vmatpush2.msra.mxu0 0.0
    %983 = vmatprep.subr.mxu0 0.0
    %984 = vmatpush2.msra.mxu0 0.0
    %985 = vmatprep.subr.mxu0 0.0
    %986 = vmatpush2.msra.mxu0 0.0
    %987 = vmatprep.subr.mxu0 0.0
    %988 = vmatpush2.msra.mxu0 0.0
    %989 = vmatprep.subr.mxu0 0.0
    %990 = vmatpush2.msra.mxu0 0.0
    %991 = vmatprep.mubr.f32.mxu0 0.0
    %992 = vmatmul.mubr.f32.gmra.mxu0 %v854
    %v993 = vpop.f32.mrf.mxu0
    %v994 = vadd.f32 0.0, %v993
    %v995 = vpop.f32.mrf.mxu0
    %996 = vdwg.mxu0
    %s997 = sadd.s32 %s718, 2
    %s998 = smul.u32 %s997, 2
    %s999 = scalar_lea.vmem %s4, %s998
    %1000 = vst.msk [vmem:[%s999] sm:$0x3] %vm442, %v994
    %v1001 = vadd.f32 %v923, %v823
    %1003 = vrot.lane.b32.xlu0 %v742, 96
    %v1004 = vpop.permute.xlu0 %1003
    %1007 = vrot.lane.b32.xlu0 %v844, 96
    %v1008 = vpop.permute.xlu0 %1007
  $region22: #{decoder_forward.1} parent=0 // loop_footer
    %s150 = sadd.s32 1, %s146
  $region23: #{decoder_forward.1} parent=0 // loop_footer_branch
    %145 = sbr.rel target = $region19
  $region24: #{decoder_forward.1} parent=0 // loop_exit
    _
  // Predicated region
  $region25: #{decoder_forward.1} parent=0 // pred_check
    _
  $region26: #{decoder_forward.1} parent=0 // pred_check_branch
    %1011 = sbr.rel (0) target = $region28
  $region27: #{decoder_forward.1} parent=0 // pred_region
    _
  $region28: #{decoder_forward.1} parent=0 // pred_fallthru
    _
  // Predicated region
  $region29: #{decoder_forward.1} parent=0 // pred_check
    _
  $region30: #{decoder_forward.1} parent=0 // pred_check_branch
    %1013 = sbr.rel (0) target = $region32
  $region31: #{decoder_forward.1} parent=0 // pred_region
    _
  $region32: #{decoder_forward.1} parent=0 // pred_fallthru
    _

</llo_original>
